<compile_context>
chip_gen: v7x
topology: tpu7x:2x2x1
jax: 0.10.0
libtpu: 0.0.40
codegen_flags: <defaults>
</compile_context>

<pallas_src>
import functools

import jax
import jax.numpy as jnp
from jax import lax
from jax.experimental import pallas as pl
from jax.experimental.pallas import tpu as pltpu


def _round_up(x, m):
    return ((x + m - 1) // m) * m


def _sublane(dtype):
    # sublane packing of one 32-bit word: f32 -> 8, bf16 -> 16, int8/fp8 -> 32
    return max(8, 32 // jnp.dtype(dtype).itemsize)


def _vmem_cap_bytes():
    """Generation-aware VMEM budget (~75% of physical per-core VMEM)."""
    try:
        info = pltpu.get_tpu_info()
        cap = getattr(info, "vmem_capacity_bytes", None)
        if cap:
            return int(cap) * 3 // 4          # ~96 MiB on v5e/v6e, ~48 MiB on v7x
    except Exception:
        pass
    return 48 << 20                           # conservative fallback (v7x-safe)


def _estimate_vmem(tile, hidden, r_pad, itemsize, q_bytes, normalize):
    blocks = 4 * tile * hidden * itemsize              # double-buffered in + out blocks
    n_f32_temps = 5 if normalize else 3                # proj / xf / out / norm temps
    temps = n_f32_temps * tile * hidden * 4 + tile * r_pad * 4
    # qt gets the default double buffer (constant index_map -> fetched only once).
    return blocks + temps + 2 * q_bytes + (2 << 20)


def _pick_row_tile(rows, hidden, r_pad, itemsize, requested, q_bytes, sublane,
                   normalize, cap):
    tile = max(sublane, min(_round_up(requested, sublane), _round_up(rows, sublane)))
    while tile > sublane and _estimate_vmem(tile, hidden, r_pad, itemsize,
                                            q_bytes, normalize) > cap:
        tile = max(sublane, _round_up(tile // 2, sublane))
    # Guarantee >= 2 grid steps so the ("parallel",) axis can shard across both
    # TensorCores on v7x (harmless ~0.35us extra step elsewhere).
    if pl.cdiv(rows, tile) < 2 and rows > sublane:
        tile = max(sublane, _round_up(pl.cdiv(rows, 2), sublane))
    return tile


def _probe_kernel(*refs, inverse, normalize, mask_first, has_mean, seq_len,
                  matmul_dtype):
    if has_mean:
        x_ref, qt_ref, mean_ref, o_ref = refs
    else:
        x_ref, qt_ref, o_ref = refs
        mean_ref = None

    x = x_ref[...]                                   # (tile, H), native dtype
    qt = qt_ref[...]                                 # (R_pad, H), lane-dense
    xm = x - mean_ref[...] if has_mean else x        # fused optimize_mean subtract

    if matmul_dtype is not None:                     # optional bf16 MXU path
        lhs = xm.astype(matmul_dtype)
        rhs = qt.astype(matmul_dtype)
    else:
        lhs, rhs = xm, qt

    # coeff[r, j] = sum_h xm[r, h] * Q[h, j]  == xm @ Q  (contract both last axes,
    # no in-kernel transpose of the probe matrix).
    coeff = lax.dot_general(lhs, rhs, (((1,), (1,)), ((), ())),
                            preferred_element_type=jnp.float32)      # (tile, R_pad)
    # proj = coeff @ Q^T ; second matmul also uses the lane-dense qt directly.
    proj = jnp.dot(coeff.astype(rhs.dtype), rhs,
                   preferred_element_type=jnp.float32)               # (tile, H), f32

    if normalize:
        xf = xm.astype(jnp.float32)
        out = proj if inverse else xf - proj
        old_sq = jnp.sum(xf * xf, axis=-1, keepdims=True)
        new_sq = jnp.sum(out * out, axis=-1, keepdims=True)
        # sqrt/rsqrt go to the EUP slot; epsilon avoids Inf/NaN for rows in span(Q).
        out = (out * (jnp.sqrt(old_sq) * lax.rsqrt(new_sq + 1e-12))).astype(x.dtype)
    else:
        # Epilogue subtract stays in the native dtype (bf16 VPU on v6e/v7x).
        out = proj.astype(x.dtype) if inverse else xm - proj.astype(x.dtype)

    if mask_first:
        tile = x.shape[0]
        row = (pl.program_id(0) * tile
               + lax.broadcasted_iota(jnp.int32, (tile, 1), 0))
        out = jnp.where(row % seq_len == 0, xm.astype(out.dtype), out)

    if has_mean:
        out = out + mean_ref[...]                    # fused optimize_mean add

    o_ref[...] = out.astype(o_ref.dtype)


def prepare_probe(probe, dtype, orthogonalize=True):
    """One-time probe preprocessing (hoist/cache this when the probe is fixed).

    probe: (H, R) float32 == torch.stack(self.probe_, 1)
    Returns a lane-dense, pre-transposed, 128-row-padded (R_pad, H) matrix.
    """
    # TODO(synk): orthogonalize=False + full_batch_gs does sequential Gram-Schmidt
    # on non-orthonormal columns; only orthogonalize=True is reproduced exactly.
    q = jnp.linalg.qr(probe)[0] if orthogonalize else probe
    qt = q.T.astype(dtype)
    r = qt.shape[0]
    r_pad = _round_up(r, 128)
    if r_pad != r:
        qt = jnp.pad(qt, ((0, r_pad - r), (0, 0)))   # zero rows change nothing
    return qt


def projection_pursuit_probe_forward(hidden_states, probe=None, *, qt=None,
                                     orthogonalize=True, inverse=False,
                                     normalize=False, mask_first=False,
                                     mean=None, row_tile=1024, matmul_dtype=None):
    """Pallas implementation of ProjectionPursuitProbe.forward.

    hidden_states: (B, T, H)
    probe:         (H, R) float32, or pass a cached `qt` from prepare_probe()
    mean:          optional (H,) -- corresponds to optimize_mean=True (fused)
    matmul_dtype:  optional (e.g. jnp.bfloat16) to run the two MXU matmuls in a
                   narrower dtype on v5e when the accuracy budget allows.
    """
    # TODO(synk): ZeroMeanTransform (self.zmt) not implemented (defaults to None).
    B, T, H = hidden_states.shape
    dtype = hidden_states.dtype
    if qt is None:
        qt = prepare_probe(probe, dtype, orthogonalize)
    r_pad = qt.shape[0]
    q_bytes = int(qt.size) * jnp.dtype(qt.dtype).itemsize

    rows = B * T
    itemsize = jnp.dtype(dtype).itemsize
    sublane = _sublane(dtype)
    cap = _vmem_cap_bytes()
    tile = _pick_row_tile(rows, H, r_pad, itemsize, row_tile, q_bytes, sublane,
                          normalize, cap)
    grid = (pl.cdiv(rows, tile),)                    # ragged last block is masked
    vmem_limit = int(max(_estimate_vmem(tile, H, r_pad, itemsize, q_bytes,
                                        normalize), 16 << 20))

    x2d = hidden_states.reshape(rows, H)             # free reshape, no HBM copy

    in_specs = [
        pl.BlockSpec((tile, H), lambda i: (i, 0)),
        pl.BlockSpec((r_pad, H), lambda i: (0, 0)),
    ]
    operands = [x2d, qt]
    has_mean = mean is not None
    if has_mean:
        in_specs.append(pl.BlockSpec((1, H), lambda i: (0, 0)))
        operands.append(mean.reshape(1, H).astype(dtype))

    kernel = functools.partial(
        _probe_kernel, inverse=inverse, normalize=normalize,
        mask_first=mask_first, has_mean=has_mean, seq_len=T,
        matmul_dtype=matmul_dtype)

    out2d = pl.pallas_call(
        kernel,
        out_shape=jax.ShapeDtypeStruct((rows, H), dtype),
        grid=grid,
        in_specs=in_specs,
        out_specs=pl.BlockSpec((tile, H), lambda i: (i, 0)),
        compiler_params=pltpu.CompilerParams(
            dimension_semantics=("parallel",),
            vmem_limit_bytes=vmem_limit),
    )(*operands)

    return out2d.reshape(B, T, H)


if __name__ == "__main__":
    key = jax.random.PRNGKey(0)
    B, T, H, R = 2, 8, 32, 8          # batch, seq, num_features, rank

    k_x, k_p, k_m = jax.random.split(key, 3)
    hidden_states = jax.random.normal(k_x, (B, T, H), dtype=jnp.float32)
    # probe params: `rank` vectors of size num_features, uniform(-0.05, 0.05),
    # stacked along dim 1 (== torch.stack(self.probe_, 1)).
    probe = jax.random.uniform(k_p, (H, R), minval=-0.05, maxval=0.05,
                               dtype=jnp.float32)
    mean = 0.1 * jax.random.normal(k_m, (H,), dtype=jnp.float32)

    # Hoisted / cached probe preprocessing (QR + transpose + cast + pad).
    qt = prepare_probe(probe, hidden_states.dtype, orthogonalize=True)

    q_ref = jnp.linalg.qr(probe)[0]

    def proj_ref(x):
        return jnp.einsum("bth,hr,gr->btg", x, q_ref, q_ref)

    # Default config (orthogonalize=True, inverse=False): residual projection.
    out = jax.block_until_ready(
        projection_pursuit_probe_forward(hidden_states, qt=qt))
    ref = hidden_states - proj_ref(hidden_states)
    err = float(jnp.max(jnp.abs(out - ref)))
    assert jnp.allclose(out, ref, atol=1e-5), f"max abs err = {err}"

    # inverse=True path (full_batch_proj).
    out_inv = jax.block_until_ready(
        projection_pursuit_probe_forward(hidden_states, qt=qt, inverse=True))
    assert jnp.allclose(out_inv, proj_ref(hidden_states), atol=1e-5)

    # Fused optimize_mean + mask_first + normalize, with a ragged row count
    # (B*T not a multiple of the row tile exercises the masked edge block).
    Tr = 7
    x_r = jax.random.normal(jax.random.PRNGKey(1), (B, Tr, H), dtype=jnp.float32)
    out_r = jax.block_until_ready(
        projection_pursuit_probe_forward(x_r, qt=qt, mean=mean,
                                         mask_first=True, normalize=True))
    xm = x_r - mean[None, None, :]
    res = xm - proj_ref(xm)
    old_n = jnp.linalg.norm(xm, axis=2, keepdims=True)
    new_n = jnp.linalg.norm(res, axis=2, keepdims=True)
    res = res / new_n * old_n
    res = res.at[:, 0].set(xm[:, 0])
    ref_r = res + mean[None, None, :]
    err_r = float(jnp.max(jnp.abs(out_r - ref_r)))
    assert jnp.allclose(out_r, ref_r, atol=1e-4), f"max abs err = {err_r}"

    print("KERNEL_OK")
</pallas_src>

<mosaic_0001>
module attributes {stable_mosaic.version = 11 : i64} {
  func.func @_probe_kernel(%arg0: i32, %arg1: memref<8x32xf32, #tpu.memory_space<vmem>>, %arg2: memref<128x32xf32, #tpu.memory_space<vmem>>, %arg3: memref<8x32xf32, #tpu.memory_space<vmem>>) attributes {dimension_semantics = [#tpu.dimension_semantics<parallel>], iteration_bounds = array<i64: 2>, scalar_prefetch = 0 : i64, scratch_operands = 0 : i64, tpu.core_type = #tpu.core_type<tc>, window_params = [{transform_indices = @transform_0, window_bounds = array<i64: 8, 32>}, {pipeline_mode = #tpu.pipeline_mode<synchronous>, transform_indices = @transform_1, window_bounds = array<i64: 128, 32>}, {transform_indices = @transform_2, window_bounds = array<i64: 8, 32>}]} {
    %c0 = arith.constant 0 : index
    %c0_0 = arith.constant 0 : index
    %0 = vector.load %arg1[%c0, %c0_0] : memref<8x32xf32, #tpu.memory_space<vmem>>, vector<8x32xf32>
    %c0_1 = arith.constant 0 : index
    %c0_2 = arith.constant 0 : index
    %1 = vector.load %arg2[%c0_1, %c0_2] : memref<128x32xf32, #tpu.memory_space<vmem>>, vector<128x32xf32>
    %cst = arith.constant dense<0.000000e+00> : vector<8x128xf32>
    %2 = tpu.matmul %0, %1, %cst {dimension_numbers = #tpu.dot_dimension_numbers<[1], [1], [0], [0], [0, 0, 1, 0], [], []>} : vector<8x32xf32>, vector<128x32xf32>, vector<8x128xf32> -> vector<8x128xf32>
    %cst_3 = arith.constant dense<0.000000e+00> : vector<8x32xf32>
    %3 = tpu.matmul %2, %1, %cst_3 {dimension_numbers = #tpu.dot_dimension_numbers<[1], [0], [0], [1], [0, 0, 1, 1], [], []>} : vector<8x128xf32>, vector<128x32xf32>, vector<8x32xf32> -> vector<8x32xf32>
    %4 = arith.subf %0, %3 : vector<8x32xf32>
    %c0_4 = arith.constant 0 : index
    %c0_5 = arith.constant 0 : index
    %5 = vector.load %arg3[%c0_4, %c0_5] : memref<8x32xf32, #tpu.memory_space<vmem>>, vector<8x32xf32>
    tpu.vector_store %arg3[%c0_4, %c0_5], %4 {strides = array<i32>} : memref<8x32xf32, #tpu.memory_space<vmem>>, vector<8x32xf32>,
    return
  }
  func.func @transform_0(%arg0: i32) -> (i32, i32) {
    %c0_i32 = arith.constant 0 : i32
    %c0_i32_0 = arith.constant 0 : i32
    return %arg0, %c0_i32 : i32, i32
  }
  func.func @transform_1(%arg0: i32) -> (i32, i32) {
    %c0_i32 = arith.constant 0 : i32
    %c0_i32_0 = arith.constant 0 : i32
    %c0_i32_1 = arith.constant 0 : i32
    return %c0_i32, %c0_i32_0 : i32, i32
  }
  func.func @transform_2(%arg0: i32) -> (i32, i32) {
    %c0_i32 = arith.constant 0 : i32
    %c0_i32_0 = arith.constant 0 : i32
    return %arg0, %c0_i32 : i32, i32
  }
}

</mosaic_0001>

<llo_original>
// kernel: tpu_custom_call.1
$region0: #{tpu_custom_call.1}
  #allocation0 [shape = 'u32[]', space=smem, size = 0x4, offset = 0x4, fixed_abs, tag = 'smem constant byte address 0x4 - core index']
  #allocation1 [shape = 'u32[144,128]{1,0:T(1,128)}', space=vmem, size = 0x12000, scoped, tag = 'internal scratch']
  %s0 = inlined_call_operand.vmem [shape: f32[16,32], index: 0, kind: input, shape index: {}]
  %s1 = inlined_call_operand.vmem [shape: f32[128,32], index: 1, kind: input, shape index: {}]
  %s2 = inlined_call_operand.hbm [shape: f32[16,32], index: 2, kind: output, shape index: {}]
  %s3 = sld [smem:[#allocation0]]
  $region41: #{tpu_custom_call.1} parent=0
    _
  %s5 = ssub.s32 1, %s3
  %s6 = scalar_select 0, %s5, %s3
  $region1: #{tpu_custom_call.1} parent=0
    #allocation2 [shape = 'u8[8192]{0}', space=vmem, size = 0x2000, scoped, tag = 'output window, operand 0']
    #allocation3 [shape = 's32[2]{0}', space=sflag, size = 0x8, scoped, tag = 'scoped memory for tpu_custom_call.1']
    %7 = vsyncpa [#allocation3], 0
    %s8 = scalar_lea.sflag [#allocation3], 1
    %9 = vsyncpa %s8, 0
    loop: start=0, step=1, limit=4
    $region2: #{tpu_custom_call.1} parent=1 // loop_pre_header
      _
    $region3: #{tpu_custom_call.1} parent=1 // loop_header
      %s11 = sphi 0, %s15
      %p12 = scmp.ge.s32.totalorder %s11, 4
      %s21 = sphi 0, %s23
      %s24 = sphi 0, %s21
      %s25 = sphi 0, %s24
      %s41 = sphi 0, %s25
      %s45 = sphi 0, %s45
      %s47 = sphi 0, %s45
      %s48 = sphi 0, %s47
      %s62 = sphi 0, %s48
      %s68 = sphi 0, %s70
      %s71 = sphi 0, %s68
      %s72 = sphi 0, %s71
      %s88 = sphi 0, %s72
    $region4: #{tpu_custom_call.1} parent=1 // loop_header_branch
      %14 = sbr.rel (%p12) target = $region8
    $region5: #{tpu_custom_call.1} parent=1 // loop_body
      %s16 = ssub.s32 %s11, 1
      %s17 = ssub.s32 %s11, 2
      %s18 = sadd.s32 %s11, 1
      %s19 = ssub.s32 %s11, %s18
      %p20 = scmp.eq.s32.totalorder %s19, 0
      %s22 = sadd.s32 %s21, 1
      %s23 = scalar_select %p20, %s21, %s22
      %p26 = pneg %p20
      %p27 = scmp.eq.s32.totalorder %s11, 1
      %p28 = por %p26, %p27
      %p29 = scmp.ne.s32.totalorder %s21, %s24
      %p30 = scmp.eq.s32.totalorder %s11, 0
      %p31 = por %p29, %p30
      %p32 = scmp.ne.s32.totalorder %s21, %s24
      %p33 = scmp.eq.s32.totalorder %s16, 1
      %p34 = por %p32, %p33
      %p35 = scmp.ne.s32.totalorder %s24, %s25
      %p36 = scmp.eq.s32.totalorder %s16, 0
      %p37 = por %p35, %p36
      %p38 = scmp.ne.s32.totalorder %s24, %s25
      %p39 = scmp.eq.s32.totalorder %s17, 1
      %p40 = por %p38, %p39
      %p42 = scmp.ne.s32.totalorder %s25, %s41
      %p43 = scmp.eq.s32.totalorder %s17, 0
      %p44 = por %p42, %p43
      %s46 = sadd.s32 %s45, 1
      %p49 = scmp.eq.s32.totalorder %s11, 1
      %p50 = scmp.ne.s32.totalorder %s45, %s47
      %p51 = scmp.eq.s32.totalorder %s11, 0
      %p52 = por %p50, %p51
      %p53 = scmp.ne.s32.totalorder %s45, %s47
      %p54 = scmp.eq.s32.totalorder %s16, 1
      %p55 = por %p53, %p54
      %p56 = scmp.ne.s32.totalorder %s47, %s48
      %p57 = scmp.eq.s32.totalorder %s16, 0
      %p58 = por %p56, %p57
      %p59 = scmp.ne.s32.totalorder %s47, %s48
      %p60 = scmp.eq.s32.totalorder %s17, 1
      %p61 = por %p59, %p60
      %p63 = scmp.ne.s32.totalorder %s48, %s62
      %p64 = scmp.eq.s32.totalorder %s17, 0
      %p65 = por %p63, %p64
      %s66 = ssub.s32 %s11, %s18
      %p67 = scmp.eq.s32.totalorder %s66, 0
      %s69 = sadd.s32 %s68, 1
      %s70 = scalar_select %p67, %s68, %s69
      %p73 = pneg %p67
      %p74 = scmp.eq.s32.totalorder %s11, 1
      %p75 = por %p73, %p74
      %p76 = scmp.ne.s32.totalorder %s68, %s71
      %p77 = scmp.eq.s32.totalorder %s11, 0
      %p78 = por %p76, %p77
      %p79 = scmp.ne.s32.totalorder %s68, %s71
      %p80 = scmp.eq.s32.totalorder %s16, 1
      %p81 = por %p79, %p80
      %p82 = scmp.ne.s32.totalorder %s71, %s72
      %p83 = scmp.eq.s32.totalorder %s16, 0
      %p84 = por %p82, %p83
      %p85 = scmp.ne.s32.totalorder %s71, %s72
      %p86 = scmp.eq.s32.totalorder %s17, 1
      %p87 = por %p85, %p86
      %p89 = scmp.ne.s32.totalorder %s72, %s88
      %p90 = scmp.eq.s32.totalorder %s17, 0
      %p91 = por %p89, %p90
      %p92 = scmp.le.s32.totalorder 1, %s11
      %p93 = scmp.lt.s32.totalorder %s11, 3
      %p94 = pnand %p92, %p93
      %p95 = pneg %p94
      // Predicated region
      $region9: #{tpu_custom_call.1} parent=5 // pred_check
        _
      $region10: #{tpu_custom_call.1} parent=5 // pred_check_branch
        %97 = sbr.rel (%p94) target = $region12
      $region11: #{tpu_custom_call.1} parent=5 // pred_region
        %s98 = ssub.s32 %s11, 1
        // Predicated region
        $region13: #{tpu_custom_call.1} parent=11 // pred_check
          %p99 = pneg %p58
        $region14: #{tpu_custom_call.1} parent=11 // pred_check_branch
          %101 = sbr.rel (%p99) target = $region16
        $region15: #{tpu_custom_call.1} parent=11 // pred_region
          _
        $region16: #{tpu_custom_call.1} parent=11 // pred_fallthru
          _
      $region12: #{tpu_custom_call.1} parent=5 // pred_fallthru
        _
      %p102 = scmp.lt.s32.totalorder %s11, 2
      // Predicated region
      $region17: #{tpu_custom_call.1} parent=5 // pred_check
        %p103 = pneg %p102
      $region18: #{tpu_custom_call.1} parent=5 // pred_check_branch
        %105 = sbr.rel (%p103) target = $region20
      $region19: #{tpu_custom_call.1} parent=5 // pred_region
        // Predicated region
        $region21: #{tpu_custom_call.1} parent=19 // pred_check
          %p106 = pneg %p31
        $region22: #{tpu_custom_call.1} parent=19 // pred_check_branch
          %108 = sbr.rel (%p106) target = $region24
        $region23: #{tpu_custom_call.1} parent=19 // pred_region
          %p109 = scmp.lt.s32.totalorder %s11, 1
          %s110 = scalar_select %p109, %s11, 1
          %s111 = smul.addr %s110, 8
          %s112 = scalar_lea.vmem %s0, %s111
        $region24: #{tpu_custom_call.1} parent=19 // pred_fallthru
          _
      $region20: #{tpu_custom_call.1} parent=5 // pred_fallthru
        _
      %p113 = scmp.le.s32.totalorder 1, %s11
      %p114 = scmp.lt.s32.totalorder %s11, 3
      %p115 = pnand %p113, %p114
      %p116 = pneg %p115
      // Predicated region
      $region25: #{tpu_custom_call.1} parent=5 // pred_check
        _
      $region26: #{tpu_custom_call.1} parent=5 // pred_check_branch
        %118 = sbr.rel (%p115) target = $region28
      $region27: #{tpu_custom_call.1} parent=5 // pred_region
        %s119 = ssub.s32 %s11, 1
        %p120 = scmp.lt.s32.totalorder %s16, 1
        %s121 = scalar_select %p120, %s16, 1
        %s122 = smul.addr %s121, 8
        %s123 = scalar_lea.vmem %s0, %s122
        %p124 = pneg %p37
        %p125 = pneg %p34
        %p126 = pneg %p58
        %p127 = pneg %p55
        %p128 = pneg %p84
        %p129 = pneg %p81
        %s130 = sand.u32 %s71, 1
        %s131 = scalar_lea.sflag [#allocation3], %s130
        %s132 = sand.u32 %s71, 1
        %s133 = smul.addr %s132, 8
        %s134 = scalar_lea.vmem [#allocation2], %s133
        %p135 = scmp.lt.s32.totalorder %s16, 1
        %s136 = scalar_select %p135, %s16, 1
        %s137 = smul.addr %s136, 8
        %s138 = scalar_lea.vmem %s0, %s137
        %v139 = vld [vmem:[%s138] sm:$0xff]
        %v140 = vld [vmem:[%s1] sm:$0xff]
        %v141 = vld [vmem:[%s1 + $0x8] sm:$0xff]
        %v142 = vld [vmem:[%s1 + $0x10] sm:$0xff]
        %v143 = vld [vmem:[%s1 + $0x18] sm:$0xff]
        %v144 = vld [vmem:[%s1 + $0x20] sm:$0xff]
        %v145 = vld [vmem:[%s1 + $0x28] sm:$0xff]
        %v146 = vld [vmem:[%s1 + $0x30] sm:$0xff]
        %v147 = vld [vmem:[%s1 + $0x38] sm:$0xff]
        %v148 = vld [vmem:[%s1 + $0x40] sm:$0xff]
        %v149 = vld [vmem:[%s1 + $0x48] sm:$0xff]
        %v150 = vld [vmem:[%s1 + $0x50] sm:$0xff]
        %v151 = vld [vmem:[%s1 + $0x58] sm:$0xff]
        %v152 = vld [vmem:[%s1 + $0x60] sm:$0xff]
        %v153 = vld [vmem:[%s1 + $0x68] sm:$0xff]
        %v154 = vld [vmem:[%s1 + $0x70] sm:$0xff]
        %v155 = vld [vmem:[%s1 + $0x78] sm:$0xff]
        %vm156 = vcmask 261120
        %v158 = vsel %vm156, %v139, 0
        %v161 = vsel %vm156, %v140, 0
        %v164 = vsel %vm156, %v141, 0
        %v167 = vsel %vm156, %v142, 0
        %v170 = vsel %vm156, %v143, 0
        %v173 = vsel %vm156, %v144, 0
        %v176 = vsel %vm156, %v145, 0
        %v179 = vsel %vm156, %v146, 0
        %v182 = vsel %vm156, %v147, 0
        %v185 = vsel %vm156, %v148, 0
        %v188 = vsel %vm156, %v149, 0
        %v191 = vsel %vm156, %v150, 0
        %v194 = vsel %vm156, %v151, 0
        %v197 = vsel %vm156, %v152, 0
        %v200 = vsel %vm156, %v153, 0
        %v203 = vsel %vm156, %v154, 0
        %v206 = vsel %vm156, %v155, 0
        %208 = vmatprep.subr.mxu0 0.0
        %209 = vmatpush1.xpose.msra.mxu0 %v161
        %210 = vmatprep.subr.mxu0 0.0
        %211 = vmatpush1.xpose.msra.mxu0 %v164
        %212 = vmatprep.subr.mxu0 0.0
        %213 = vmatpush1.xpose.msra.mxu0 %v167
        %214 = vmatprep.subr.mxu0 0.0
        %215 = vmatpush1.xpose.msra.mxu0 %v170
        %216 = vmatprep.subr.mxu0 0.0
        %217 = vmatpush1.xpose.msra.mxu0 %v173
        %218 = vmatprep.subr.mxu0 0.0
        %219 = vmatpush1.xpose.msra.mxu0 %v176
        %220 = vmatprep.subr.mxu0 0.0
        %221 = vmatpush1.xpose.msra.mxu0 %v179
        %222 = vmatprep.subr.mxu0 0.0
        %223 = vmatpush1.xpose.msra.mxu0 %v182
        %224 = vmatprep.subr.mxu0 0.0
        %225 = vmatpush1.xpose.msra.mxu0 %v185
        %226 = vmatprep.subr.mxu0 0.0
        %227 = vmatpush1.xpose.msra.mxu0 %v188
        %228 = vmatprep.subr.mxu0 0.0
        %229 = vmatpush1.xpose.msra.mxu0 %v191
        %230 = vmatprep.subr.mxu0 0.0
        %231 = vmatpush1.xpose.msra.mxu0 %v194
        %232 = vmatprep.subr.mxu0 0.0
        %233 = vmatpush1.xpose.msra.mxu0 %v197
        %234 = vmatprep.subr.mxu0 0.0
        %235 = vmatpush1.xpose.msra.mxu0 %v200
        %236 = vmatprep.subr.mxu0 0.0
        %237 = vmatpush1.xpose.msra.mxu0 %v203
        %238 = vmatprep.subr.mxu0 0.0
        %239 = vmatpush1.xpose.msra.mxu0 %v206
        %240 = vmatprep.subr.mxu0 0.0
        %241 = vmatpush1.xpose.msra.mxu0 0.0
        %242 = vmatprep.subr.mxu0 0.0
        %243 = vmatpush1.xpose.msra.mxu0 0.0
        %244 = vmatprep.subr.mxu0 0.0
        %245 = vmatpush1.xpose.msra.mxu0 0.0
        %246 = vmatprep.subr.mxu0 0.0
        %247 = vmatpush1.xpose.msra.mxu0 0.0
        %248 = vmatprep.subr.mxu0 0.0
        %249 = vmatpush1.xpose.msra.mxu0 0.0
        %250 = vmatprep.subr.mxu0 0.0
        %251 = vmatpush1.xpose.msra.mxu0 0.0
        %252 = vmatprep.subr.mxu0 0.0
        %253 = vmatpush1.xpose.msra.mxu0 0.0
        %254 = vmatprep.subr.mxu0 0.0
        %255 = vmatpush1.xpose.msra.mxu0 0.0
        %256 = vmatprep.subr.mxu0 0.0
        %257 = vmatpush1.xpose.msra.mxu0 0.0
        %258 = vmatprep.subr.mxu0 0.0
        %259 = vmatpush1.xpose.msra.mxu0 0.0
        %260 = vmatprep.subr.mxu0 0.0
        %261 = vmatpush1.xpose.msra.mxu0 0.0
        %262 = vmatprep.subr.mxu0 0.0
        %263 = vmatpush1.xpose.msra.mxu0 0.0
        %264 = vmatprep.subr.mxu0 0.0
        %265 = vmatpush1.xpose.msra.mxu0 0.0
        %266 = vmatprep.subr.mxu0 0.0
        %267 = vmatpush1.xpose.msra.mxu0 0.0
        %268 = vmatprep.subr.mxu0 0.0
        %269 = vmatpush1.xpose.msra.mxu0 0.0
        %270 = vmatprep.subr.mxu0 0.0
        %271 = vmatpush1.xpose.msra.mxu0 0.0
        %272 = vmatprep.mubr.f32.mxu0 0.0
        %273 = vmatmul.mubr.f32.gmra.mrb[0].mxu0 %v158
        %v274 = vpop.f32.mrb[0].mxu0
        %v275 = vadd.f32 0.0, %v274
        %v276 = vpop.f32.mrb[0].mxu0
        %277 = vdwg.mxu0
        %278 = vmatprep.subr.mxu0 0.0
        %279 = vmatpush1.msra.mxu0 %v140
        %280 = vmatprep.subr.mxu0 0.0
        %281 = vmatpush1.msra.mxu0 %v141
        %282 = vmatprep.subr.mxu0 0.0
        %283 = vmatpush1.msra.mxu0 %v142
        %284 = vmatprep.subr.mxu0 0.0
        %285 = vmatpush1.msra.mxu0 %v143
        %286 = vmatprep.subr.mxu0 0.0
        %287 = vmatpush1.msra.mxu0 %v144
        %288 = vmatprep.subr.mxu0 0.0
        %289 = vmatpush1.msra.mxu0 %v145
        %290 = vmatprep.subr.mxu0 0.0
        %291 = vmatpush1.msra.mxu0 %v146
        %292 = vmatprep.subr.mxu0 0.0
        %293 = vmatpush1.msra.mxu0 %v147
        %294 = vmatprep.subr.mxu0 0.0
        %295 = vmatpush1.msra.mxu0 %v148
        %296 = vmatprep.subr.mxu0 0.0
        %297 = vmatpush1.msra.mxu0 %v149
        %298 = vmatprep.subr.mxu0 0.0
        %299 = vmatpush1.msra.mxu0 %v150
        %300 = vmatprep.subr.mxu0 0.0
        %301 = vmatpush1.msra.mxu0 %v151
        %302 = vmatprep.subr.mxu0 0.0
        %303 = vmatpush1.msra.mxu0 %v152
        %304 = vmatprep.subr.mxu0 0.0
        %305 = vmatpush1.msra.mxu0 %v153
        %306 = vmatprep.subr.mxu0 0.0
        %307 = vmatpush1.msra.mxu0 %v154
        %308 = vmatprep.subr.mxu0 0.0
        %309 = vmatpush1.msra.mxu0 %v155
        %310 = vmatprep.subr.mxu0 0.0
        %311 = vmatpush1.msra.mxu0 0.0
        %312 = vmatprep.subr.mxu0 0.0
        %313 = vmatpush1.msra.mxu0 0.0
        %314 = vmatprep.subr.mxu0 0.0
        %315 = vmatpush1.msra.mxu0 0.0
        %316 = vmatprep.subr.mxu0 0.0
        %317 = vmatpush1.msra.mxu0 0.0
        %318 = vmatprep.subr.mxu0 0.0
        %319 = vmatpush1.msra.mxu0 0.0
        %320 = vmatprep.subr.mxu0 0.0
        %321 = vmatpush1.msra.mxu0 0.0
        %322 = vmatprep.subr.mxu0 0.0
        %323 = vmatpush1.msra.mxu0 0.0
        %324 = vmatprep.subr.mxu0 0.0
        %325 = vmatpush1.msra.mxu0 0.0
        %326 = vmatprep.subr.mxu0 0.0
        %327 = vmatpush1.msra.mxu0 0.0
        %328 = vmatprep.subr.mxu0 0.0
        %329 = vmatpush1.msra.mxu0 0.0
        %330 = vmatprep.subr.mxu0 0.0
        %331 = vmatpush1.msra.mxu0 0.0
        %332 = vmatprep.subr.mxu0 0.0
        %333 = vmatpush1.msra.mxu0 0.0
        %334 = vmatprep.subr.mxu0 0.0
        %335 = vmatpush1.msra.mxu0 0.0
        %336 = vmatprep.subr.mxu0 0.0
        %337 = vmatpush1.msra.mxu0 0.0
        %338 = vmatprep.subr.mxu0 0.0
        %339 = vmatpush1.msra.mxu0 0.0
        %340 = vmatprep.subr.mxu0 0.0
        %341 = vmatpush1.msra.mxu0 0.0
        %342 = vmatprep.mubr.f32.mxu0 0.0
        %343 = vmatmul.mubr.f32.gmra.mrb[0].mxu0 %v275
        %v344 = vpop.f32.mrb[0].mxu0
        %v345 = vadd.f32 0.0, %v344
        %v346 = vpop.f32.mrb[0].mxu0
        %347 = vdwg.mxu0
        %v348 = vsub.f32 %v139, %v345
        %349 = vst.msk [vmem:[%s134] sm:$0xff] %vm156, %v348
        %s350 = sand.u32 %s71, 1
        %s351 = scalar_lea.sflag [#allocation3], %s350
        %s352 = sand.u32 %s71, 1
        %s353 = smul.addr %s352, 8
        %s354 = scalar_lea.vmem [#allocation2], %s353
        // Predicated region
        $region29: #{tpu_custom_call.1} parent=27 // pred_check
          %p355 = pneg %p81
        $region30: #{tpu_custom_call.1} parent=27 // pred_check_branch
          %357 = sbr.rel (%p355) target = $region32
        $region31: #{tpu_custom_call.1} parent=27 // pred_region
          %s359 = ssub.s32 128, 128
          %360 = vsyncadd %s351, %s359
          %s361 = smul.addr %s16, 128
          %s362 = scalar_lea.hbm %s2, %s361
          %s364 = sshll.u32 %s354, 4
          %s365 = int_to_ptr.vmem [resolvable:$true] %s364
          %367 = dma.vmem_to_hbm [thread:$0]  %s365, 128, %s362, %s351
        $region32: #{tpu_custom_call.1} parent=27 // pred_fallthru
          _
      $region28: #{tpu_custom_call.1} parent=5 // pred_fallthru
        _
      %p368 = scmp.le.s32.totalorder 2, %s11
      // Predicated region
      $region33: #{tpu_custom_call.1} parent=5 // pred_check
        %p369 = pneg %p368
      $region34: #{tpu_custom_call.1} parent=5 // pred_check_branch
        %371 = sbr.rel (%p369) target = $region36
      $region35: #{tpu_custom_call.1} parent=5 // pred_region
        %s372 = ssub.s32 %s11, 2
        // Predicated region
        $region37: #{tpu_custom_call.1} parent=35 // pred_check
          %p373 = pneg %p87
        $region38: #{tpu_custom_call.1} parent=35 // pred_check_branch
          %375 = sbr.rel (%p373) target = $region40
        $region39: #{tpu_custom_call.1} parent=35 // pred_region
          %s376 = sand.u32 %s72, 1
          %s377 = scalar_lea.sflag [#allocation3], %s376
          %s378 = sand.u32 %s72, 1
          %s379 = smul.addr %s378, 8
          %s380 = scalar_lea.vmem [#allocation2], %s379
          %381 = dma.done %s377, 128
        $region40: #{tpu_custom_call.1} parent=35 // pred_fallthru
          _
      $region36: #{tpu_custom_call.1} parent=5 // pred_fallthru
        _
    $region6: #{tpu_custom_call.1} parent=1 // loop_footer
      %s15 = sadd.s32 1, %s11
    $region7: #{tpu_custom_call.1} parent=1 // loop_footer_branch
      %10 = sbr.rel target = $region3
    $region8: #{tpu_custom_call.1} parent=1 // loop_exit
      _
    %382 = vsyncpa [#allocation3], 1
    %s383 = scalar_lea.sflag [#allocation3], 1
    %384 = vsyncpa %s383, 1

</llo_original>
